<compile_context>
chip_gen: v7x
topology: tpu7x:2x2x1
jax: 0.10.0
libtpu: 0.0.40
codegen_flags: <defaults>
</compile_context>

<pallas_src>
import functools

import jax
import jax.numpy as jnp
from jax.experimental import pallas as pl
from jax.experimental.pallas import tpu as pltpu


def _round_up(n: int, m: int) -> int:
    return ((n + m - 1) // m) * m


def _generator_kernel(x_ref, w1_ref, b1_ref, w2_ref, b2_ref, o_ref):
    # fc1: x @ W1 + b1  (MXU matmul, f32 accumulation)
    h = jnp.dot(x_ref[...], w1_ref[...], preferred_element_type=jnp.float32)
    h = h + b1_ref[...].astype(jnp.float32)
    # LeakyReLU(negative_slope=0.1): mul + max (one fewer VALU op than select)
    h = jnp.maximum(h, 0.1 * h)
    # fc2: h @ W2 + b2 (cast activations to weight dtype for the MXU)
    y = jnp.dot(h.astype(w2_ref.dtype), w2_ref[...],
                preferred_element_type=jnp.float32)
    y = y + b2_ref[...].astype(jnp.float32)
    # Tanh computed in f32 on the EUP, cast on store
    o_ref[...] = jnp.tanh(y).astype(o_ref.dtype)


def prepare_generator_params(w1, b1, w2, b2, dtype=None):
    """One-time (parameter-load-time) padding and optional dtype cast.

    w1: (input_size, hidden), w2: (hidden, output); biases (dim,) or (1, dim).
    Pads the hidden/output feature dims to multiples of 128 (lane-dense). The
    contraction dim of w1 (input_size) is left unpadded so x never needs a
    per-call feature pad. Pass dtype=jnp.bfloat16 for the bf16 weight path.
    """
    input_size, hidden = w1.shape
    out_dim = w2.shape[1]
    if dtype is not None:
        w1, b1, w2, b2 = (a.astype(dtype) for a in (w1, b1, w2, b2))
    hid_p = _round_up(hidden, 128)
    out_p = _round_up(out_dim, 128)
    w1p = jnp.zeros((input_size, hid_p), w1.dtype).at[:, :hidden].set(w1)
    b1p = jnp.zeros((1, hid_p), b1.dtype).at[:, :hidden].set(
        b1.reshape(1, hidden))
    w2p = jnp.zeros((hid_p, out_p), w2.dtype).at[:hidden, :out_dim].set(w2)
    b2p = jnp.zeros((1, out_p), b2.dtype).at[:, :out_dim].set(
        b2.reshape(1, out_dim))
    return dict(w1=w1p, b1=b1p, w2=w2p, b2=b2p, out_dim=out_dim)


@functools.partial(jax.jit, static_argnames=("out_dim", "block_b"))
def _generator_forward(x, w1p, b1p, w2p, b2p, *, out_dim, block_b):
    B, input_size = x.shape
    assert w1p.shape[0] == input_size, "w1 must be (input_size, hidden_pad)"
    hid_p = w1p.shape[1]
    out_p = w2p.shape[1]

    # ---- Batch tiling: no batch padding. Single full block for small B,
    # otherwise MXU-friendly tiles with a masked ragged tail. ----------------
    if B <= block_b:
        tb = B                                   # full-dim block (always legal)
    elif block_b >= 256:
        tb = (block_b // 256) * 256              # multiple of 256 for the MXU
    else:
        tb = max(8, (block_b // 8) * 8)          # at least sublane-aligned
    grid = (pl.cdiv(B, tb),)

    def itemsize(a):
        return jnp.dtype(a.dtype).itemsize

    weight_bytes = (w1p.size * itemsize(w1p) + b1p.size * itemsize(b1p)
                    + w2p.size * itemsize(w2p) + b2p.size * itemsize(b2p))

    # Advisory scheduler hint (per-operand itemsizes, unpadded x traffic).
    cost = pl.CostEstimate(
        flops=2 * B * (input_size * hid_p + hid_p * out_p),
        transcendentals=B * out_p,
        bytes_accessed=int(x.size * itemsize(x) + weight_bytes
                           + B * out_p * itemsize(x)),
    )

    # VMEM budget: double-buffered x/out tiles + weight buffers + scratch,
    # kept well under v7x's 64 MiB per-core VMEM.
    tile_bytes = tb * (input_size + out_p) * itemsize(x)
    vmem_limit = int(min(max(2 * tile_bytes + 2 * weight_bytes + (2 << 20),
                             8 << 20),
                         56 << 20))

    out = pl.pallas_call(
        _generator_kernel,
        out_shape=jax.ShapeDtypeStruct((B, out_p), x.dtype),
        grid_spec=pl.GridSpec(
            grid=grid,
            in_specs=[
                # x: tiled over batch, full (unpadded) feature dim
                pl.BlockSpec((tb, input_size), lambda i: (i, 0)),
                # weights / biases: constant index map -> VMEM-resident
                pl.BlockSpec((input_size, hid_p), lambda i: (0, 0)),
                pl.BlockSpec((1, hid_p), lambda i: (0, 0)),
                pl.BlockSpec((hid_p, out_p), lambda i: (0, 0)),
                pl.BlockSpec((1, out_p), lambda i: (0, 0)),
            ],
            out_specs=pl.BlockSpec((tb, out_p), lambda i: (i, 0)),
        ),
        compiler_params=pltpu.CompilerParams(
            # Batch tiles are independent -> shard across TensorCores (v7x).
            dimension_semantics=("parallel",),
            vmem_limit_bytes=vmem_limit,
        ),
        cost_estimate=cost,
    )(x, w1p, b1p, w2p, b2p)

    # Strip the lane padding of the output feature dim (no-op if aligned).
    if out_p != out_dim:
        out = out[:, :out_dim]
    return out


def generator_forward(x, params, *, block_b: int = 1024):
    """x: (B, input_size); params: output of prepare_generator_params()."""
    return _generator_forward(x, params["w1"], params["b1"], params["w2"],
                              params["b2"], out_dim=params["out_dim"],
                              block_b=block_b)


def reference_forward(x, w1, b1, w2, b2):
    h = x @ w1 + b1.reshape(1, -1)
    h = jnp.where(h > 0, h, 0.1 * h)
    y = h @ w2 + b2.reshape(1, -1)
    return jnp.tanh(y)


if __name__ == "__main__":
    # Small shapes consistent with the module's forward.
    batch = 8
    input_size = 16
    hidden_dim = 32
    output_size = 16

    key = jax.random.PRNGKey(0)
    kx, kw1, kb1, kw2, kb2 = jax.random.split(key, 5)

    x = jax.random.normal(kx, (batch, input_size), dtype=jnp.float32)

    # PyTorch-Linear-like uniform fan-in init, stored pre-transposed (x @ W).
    lim1 = 1.0 / jnp.sqrt(input_size)
    w1 = jax.random.uniform(kw1, (input_size, hidden_dim),
                            minval=-lim1, maxval=lim1, dtype=jnp.float32)
    b1 = jax.random.uniform(kb1, (1, hidden_dim),
                            minval=-lim1, maxval=lim1, dtype=jnp.float32)

    lim2 = 1.0 / jnp.sqrt(hidden_dim)
    w2 = jax.random.uniform(kw2, (hidden_dim, output_size),
                            minval=-lim2, maxval=lim2, dtype=jnp.float32)
    b2 = jax.random.uniform(kb2, (1, output_size),
                            minval=-lim2, maxval=lim2, dtype=jnp.float32)

    ref = reference_forward(x, w1, b1, w2, b2)

    # ---- f32 path ----------------------------------------------------------
    params_f32 = prepare_generator_params(w1, b1, w2, b2)   # once, offline
    out = generator_forward(x, params_f32)
    out = jax.block_until_ready(out)
    assert out.shape == (batch, output_size)
    assert jnp.allclose(out, ref, atol=1e-5, rtol=1e-5)

    # ---- bf16 path (memory-bound win on all gens; bounded tanh output) -----
    params_bf16 = prepare_generator_params(w1, b1, w2, b2, dtype=jnp.bfloat16)
    out_bf16 = generator_forward(x.astype(jnp.bfloat16), params_bf16)
    out_bf16 = jax.block_until_ready(out_bf16)
    assert out_bf16.shape == (batch, output_size)
    assert jnp.allclose(out_bf16.astype(jnp.float32), ref, atol=5e-2)

    print("KERNEL_OK")
</pallas_src>

<mosaic_0001>
module attributes {stable_mosaic.version = 11 : i64} {
  func.func @_generator_kernel(%arg0: i32, %arg1: memref<8x16xf32, #tpu.memory_space<vmem>>, %arg2: memref<16x128xf32, #tpu.memory_space<vmem>>, %arg3: memref<1x128xf32, #tpu.memory_space<vmem>>, %arg4: memref<128x128xf32, #tpu.memory_space<vmem>>, %arg5: memref<1x128xf32, #tpu.memory_space<vmem>>, %arg6: memref<8x128xf32, #tpu.memory_space<vmem>>) attributes {dimension_semantics = [#tpu.dimension_semantics<parallel>], iteration_bounds = array<i64: 1>, scalar_prefetch = 0 : i64, scratch_operands = 0 : i64, tpu.core_type = #tpu.core_type<tc>, window_params = [{transform_indices = @transform_0, window_bounds = array<i64: 8, 16>}, {pipeline_mode = #tpu.pipeline_mode<synchronous>, transform_indices = @transform_1, window_bounds = array<i64: 16, 128>}, {pipeline_mode = #tpu.pipeline_mode<synchronous>, transform_indices = @transform_2, window_bounds = array<i64: 1, 128>}, {pipeline_mode = #tpu.pipeline_mode<synchronous>, transform_indices = @transform_3, window_bounds = array<i64: 128, 128>}, {pipeline_mode = #tpu.pipeline_mode<synchronous>, transform_indices = @transform_4, window_bounds = array<i64: 1, 128>}, {transform_indices = @transform_5, window_bounds = array<i64: 8, 128>}]} {
    %c0 = arith.constant 0 : index
    %c0_0 = arith.constant 0 : index
    %0 = vector.load %arg1[%c0, %c0_0] : memref<8x16xf32, #tpu.memory_space<vmem>>, vector<8x16xf32>
    %c0_1 = arith.constant 0 : index
    %c0_2 = arith.constant 0 : index
    %1 = vector.load %arg2[%c0_1, %c0_2] : memref<16x128xf32, #tpu.memory_space<vmem>>, vector<16x128xf32>
    %cst = arith.constant dense<0.000000e+00> : vector<8x128xf32>
    %2 = tpu.matmul %0, %1, %cst {dimension_numbers = #tpu.dot_dimension_numbers<[1], [0], [0], [1], [0, 0, 1, 1], [], []>} : vector<8x16xf32>, vector<16x128xf32>, vector<8x128xf32> -> vector<8x128xf32>
    %c0_3 = arith.constant 0 : index
    %c0_4 = arith.constant 0 : index
    %3 = vector.load %arg3[%c0_3, %c0_4] : memref<1x128xf32, #tpu.memory_space<vmem>>, vector<1x128xf32>
    %4 = vector.broadcast %3 : vector<1x128xf32> to vector<8x128xf32>
    %5 = arith.addf %2, %4 : vector<8x128xf32>
    %cst_5 = arith.constant 1.000000e-01 : f32
    %6 = vector.broadcast %cst_5 : f32 to vector<8x128xf32>
    %7 = arith.mulf %6, %5 : vector<8x128xf32>
    %8 = arith.maximumf %5, %7 : vector<8x128xf32>
    %c0_6 = arith.constant 0 : index
    %c0_7 = arith.constant 0 : index
    %9 = vector.load %arg4[%c0_6, %c0_7] : memref<128x128xf32, #tpu.memory_space<vmem>>, vector<128x128xf32>
    %cst_8 = arith.constant dense<0.000000e+00> : vector<8x128xf32>
    %10 = tpu.matmul %8, %9, %cst_8 {dimension_numbers = #tpu.dot_dimension_numbers<[1], [0], [0], [1], [0, 0, 1, 1], [], []>} : vector<8x128xf32>, vector<128x128xf32>, vector<8x128xf32> -> vector<8x128xf32>
    %c0_9 = arith.constant 0 : index
    %c0_10 = arith.constant 0 : index
    %11 = vector.load %arg5[%c0_9, %c0_10] : memref<1x128xf32, #tpu.memory_space<vmem>>, vector<1x128xf32>
    %12 = vector.broadcast %11 : vector<1x128xf32> to vector<8x128xf32>
    %13 = arith.addf %10, %12 : vector<8x128xf32>
    %14 = math.tanh %13 : vector<8x128xf32>
    %c0_11 = arith.constant 0 : index
    %c0_12 = arith.constant 0 : index
    %15 = vector.load %arg6[%c0_11, %c0_12] : memref<8x128xf32, #tpu.memory_space<vmem>>, vector<8x128xf32>
    tpu.vector_store %arg6[%c0_11, %c0_12], %14 {strides = array<i32>} : memref<8x128xf32, #tpu.memory_space<vmem>>, vector<8x128xf32>,
    return
  }
  func.func @transform_0(%arg0: i32) -> (i32, i32) {
    %c0_i32 = arith.constant 0 : i32
    %c0_i32_0 = arith.constant 0 : i32
    return %arg0, %c0_i32 : i32, i32
  }
  func.func @transform_1(%arg0: i32) -> (i32, i32) {
    %c0_i32 = arith.constant 0 : i32
    %c0_i32_0 = arith.constant 0 : i32
    %c0_i32_1 = arith.constant 0 : i32
    return %c0_i32, %c0_i32_0 : i32, i32
  }
  func.func @transform_2(%arg0: i32) -> (i32, i32) {
    %c0_i32 = arith.constant 0 : i32
    %c0_i32_0 = arith.constant 0 : i32
    %c0_i32_1 = arith.constant 0 : i32
    return %c0_i32, %c0_i32_0 : i32, i32
  }
  func.func @transform_3(%arg0: i32) -> (i32, i32) {
    %c0_i32 = arith.constant 0 : i32
    %c0_i32_0 = arith.constant 0 : i32
    %c0_i32_1 = arith.constant 0 : i32
    return %c0_i32, %c0_i32_0 : i32, i32
  }
  func.func @transform_4(%arg0: i32) -> (i32, i32) {
    %c0_i32 = arith.constant 0 : i32
    %c0_i32_0 = arith.constant 0 : i32
    %c0_i32_1 = arith.constant 0 : i32
    return %c0_i32, %c0_i32_0 : i32, i32
  }
  func.func @transform_5(%arg0: i32) -> (i32, i32) {
    %c0_i32 = arith.constant 0 : i32
    %c0_i32_0 = arith.constant 0 : i32
    return %arg0, %c0_i32 : i32, i32
  }
}

</mosaic_0001>

<llo_original>
// kernel: _generator_forward.1
$region0: #{_generator_forward.1}
  #allocation0 [shape = 'u32[]', space=smem, size = 0x4, offset = 0x4, fixed_abs, tag = 'smem constant byte address 0x4 - core index']
  #allocation1 [shape = 'u32[144,128]{1,0:T(1,128)}', space=vmem, size = 0x12000, scoped, tag = 'internal scratch']
  %s0 = inlined_call_operand.hbm [shape: f32[8,16], index: 0, kind: input, shape index: {}]
  %s1 = inlined_call_operand.hbm [shape: f32[16,128], index: 1, kind: input, shape index: {}]
  %s2 = inlined_call_operand.vmem [shape: f32[1,128], index: 2, kind: input, shape index: {}]
  %s3 = inlined_call_operand.hbm [shape: f32[128,128], index: 3, kind: input, shape index: {}]
  %s4 = inlined_call_operand.vmem [shape: f32[1,128], index: 4, kind: input, shape index: {}]
  %s5 = inlined_call_operand.hbm [shape: f32[8,128], index: 5, kind: output, shape index: {}]
  %s6 = sld [smem:[#allocation0]]
  $region42: #{_generator_forward.1} parent=0
    _
  %s8 = ssub.s32 1, %s6
  %s9 = scalar_select 0, %s8, %s6
  $region1: #{_generator_forward.1} parent=0
    #allocation2 [shape = 'u8[4096]{0}', space=vmem, size = 0x1000, scoped, tag = 'input window, operand 0, single buffered']
    #allocation3 [shape = 's32[1]{0}', space=sflag, size = 0x4, scoped, tag = 'scoped memory for _generator_forward.1']
    #allocation4 [shape = 's32[1]{0}', space=sflag, size = 0x4, scoped, tag = 'scoped memory for _generator_forward.1']
    #allocation5 [shape = 'u8[8192]{0}', space=vmem, size = 0x2000, scoped, tag = 'input window, operand 1, single buffered']
    #allocation6 [shape = 's32[1]{0}', space=sflag, size = 0x4, scoped, tag = 'scoped memory for _generator_forward.1']
    #allocation7 [shape = 'u8[65536]{0}', space=vmem, size = 0x10000, scoped, tag = 'input window, operand 3, single buffered']
    #allocation8 [shape = 'u8[4096]{0}', space=vmem, size = 0x1000, scoped, tag = 'output window, operand 0, single buffered']
    %10 = vsyncpa [#allocation3], 0
    %11 = vsyncpa [#allocation6], 0
    %12 = vsyncpa [#allocation4], 0
    // Predicated region
    $region2: #{_generator_forward.1} parent=1 // pred_check
      _
    $region3: #{_generator_forward.1} parent=1 // pred_check_branch
      %14 = sbr.rel (0) target = $region5
    $region4: #{_generator_forward.1} parent=1 // pred_region
      %s16 = ssub.s32 128, 128
      %17 = vsyncadd [#allocation3], %s16
      %s19 = sshll.u32 [#allocation2], 4
      %s20 = int_to_ptr.vmem [resolvable:$true] %s19
      %22 = dma.hbm_to_vmem [thread:$0]  %s0, 128, %s20, [#allocation3]
    $region5: #{_generator_forward.1} parent=1 // pred_fallthru
      _
    // Predicated region
    $region6: #{_generator_forward.1} parent=1 // pred_check
      _
    $region7: #{_generator_forward.1} parent=1 // pred_check_branch
      %24 = sbr.rel (0) target = $region9
    $region8: #{_generator_forward.1} parent=1 // pred_region
      %s26 = ssub.s32 256, 256
      %27 = vsyncadd [#allocation6], %s26
      %s28 = sshll.u32 [#allocation5], 4
      %s29 = int_to_ptr.vmem [resolvable:$true] %s28
      %34 = dma.hbm_to_vmem [thread:$0]  %s1, 256, %s29, [#allocation6], 128, 128, 8
    $region9: #{_generator_forward.1} parent=1 // pred_fallthru
      _
    // Predicated region
    $region10: #{_generator_forward.1} parent=1 // pred_check
      _
    $region11: #{_generator_forward.1} parent=1 // pred_check_branch
      %36 = sbr.rel (0) target = $region13
    $region12: #{_generator_forward.1} parent=1 // pred_region
      _
    $region13: #{_generator_forward.1} parent=1 // pred_fallthru
      _
    // Predicated region
    $region14: #{_generator_forward.1} parent=1 // pred_check
      _
    $region15: #{_generator_forward.1} parent=1 // pred_check_branch
      %38 = sbr.rel (0) target = $region17
    $region16: #{_generator_forward.1} parent=1 // pred_region
      %s40 = ssub.s32 2048, 2048
      %41 = vsyncadd [#allocation6], %s40
      %s42 = sshll.u32 [#allocation7], 4
      %s43 = int_to_ptr.vmem [resolvable:$true] %s42
      %48 = dma.hbm_to_vmem [thread:$0]  %s3, 2048, %s43, [#allocation6], 128, 128, 8
    $region17: #{_generator_forward.1} parent=1 // pred_fallthru
      _
    // Predicated region
    $region18: #{_generator_forward.1} parent=1 // pred_check
      _
    $region19: #{_generator_forward.1} parent=1 // pred_check_branch
      %50 = sbr.rel (0) target = $region21
    $region20: #{_generator_forward.1} parent=1 // pred_region
      _
    $region21: #{_generator_forward.1} parent=1 // pred_fallthru
      _
    // Predicated region
    $region22: #{_generator_forward.1} parent=1 // pred_check
      _
    $region23: #{_generator_forward.1} parent=1 // pred_check_branch
      %52 = sbr.rel (0) target = $region25
    $region24: #{_generator_forward.1} parent=1 // pred_region
      %53 = dma.done [#allocation3], 128
    $region25: #{_generator_forward.1} parent=1 // pred_fallthru
      _
    // Predicated region
    $region26: #{_generator_forward.1} parent=1 // pred_check
      _
    $region27: #{_generator_forward.1} parent=1 // pred_check_branch
      %55 = sbr.rel (0) target = $region29
    $region28: #{_generator_forward.1} parent=1 // pred_region
      %56 = dma.done [#allocation6], 256
    $region29: #{_generator_forward.1} parent=1 // pred_fallthru
      _
    // Predicated region
    $region30: #{_generator_forward.1} parent=1 // pred_check
      _
    $region31: #{_generator_forward.1} parent=1 // pred_check_branch
      %58 = sbr.rel (0) target = $region33
    $region32: #{_generator_forward.1} parent=1 // pred_region
      %59 = dma.done [#allocation6], 2048
    $region33: #{_generator_forward.1} parent=1 // pred_fallthru
      _
    %v60 = vld [vmem:[#allocation2] sm:$0xff]
    %v61 = vld [vmem:[#allocation5] sm:$0xff]
    %v62 = vld [vmem:[#allocation5 + $0x8] sm:$0xff]
    %v63 = vld [vmem:[%s2] sm:$0x1]
    %v65 = vlaneseq
    %v66 = vshrl.u32 %v65, 7
    %v67 = vsub.s32 0, %v66
    %v68 = vrot.slane %v63, %v67
    %vm70 = vcmask 130048
    %v72 = vsel %vm70, %v60, 0
    %74 = vmatprep.subr.mxu0 0.0
    %75 = vmatpush1.msra.mxu0 %v61
    %76 = vmatprep.subr.mxu0 0.0
    %77 = vmatpush1.msra.mxu0 %v62
    %78 = vmatprep.subr.mxu0 0.0
    %79 = vmatpush1.msra.mxu0 0.0
    %80 = vmatprep.subr.mxu0 0.0
    %81 = vmatpush1.msra.mxu0 0.0
    %82 = vmatprep.subr.mxu0 0.0
    %83 = vmatpush1.msra.mxu0 0.0
    %84 = vmatprep.subr.mxu0 0.0
    %85 = vmatpush1.msra.mxu0 0.0
    %86 = vmatprep.subr.mxu0 0.0
    %87 = vmatpush1.msra.mxu0 0.0
    %88 = vmatprep.subr.mxu0 0.0
    %89 = vmatpush1.msra.mxu0 0.0
    %90 = vmatprep.subr.mxu0 0.0
    %91 = vmatpush1.msra.mxu0 0.0
    %92 = vmatprep.subr.mxu0 0.0
    %93 = vmatpush1.msra.mxu0 0.0
    %94 = vmatprep.subr.mxu0 0.0
    %95 = vmatpush1.msra.mxu0 0.0
    %96 = vmatprep.subr.mxu0 0.0
    %97 = vmatpush1.msra.mxu0 0.0
    %98 = vmatprep.subr.mxu0 0.0
    %99 = vmatpush1.msra.mxu0 0.0
    %100 = vmatprep.subr.mxu0 0.0
    %101 = vmatpush1.msra.mxu0 0.0
    %102 = vmatprep.subr.mxu0 0.0
    %103 = vmatpush1.msra.mxu0 0.0
    %104 = vmatprep.subr.mxu0 0.0
    %105 = vmatpush1.msra.mxu0 0.0
    %106 = vmatprep.subr.mxu0 0.0
    %107 = vmatpush1.msra.mxu0 0.0
    %108 = vmatprep.subr.mxu0 0.0
    %109 = vmatpush1.msra.mxu0 0.0
    %110 = vmatprep.subr.mxu0 0.0
    %111 = vmatpush1.msra.mxu0 0.0
    %112 = vmatprep.subr.mxu0 0.0
    %113 = vmatpush1.msra.mxu0 0.0
    %114 = vmatprep.subr.mxu0 0.0
    %115 = vmatpush1.msra.mxu0 0.0
    %116 = vmatprep.subr.mxu0 0.0
    %117 = vmatpush1.msra.mxu0 0.0
    %118 = vmatprep.subr.mxu0 0.0
    %119 = vmatpush1.msra.mxu0 0.0
    %120 = vmatprep.subr.mxu0 0.0
    %121 = vmatpush1.msra.mxu0 0.0
    %122 = vmatprep.subr.mxu0 0.0
    %123 = vmatpush1.msra.mxu0 0.0
    %124 = vmatprep.subr.mxu0 0.0
    %125 = vmatpush1.msra.mxu0 0.0
    %126 = vmatprep.subr.mxu0 0.0
    %127 = vmatpush1.msra.mxu0 0.0
    %128 = vmatprep.subr.mxu0 0.0
    %129 = vmatpush1.msra.mxu0 0.0
    %130 = vmatprep.subr.mxu0 0.0
    %131 = vmatpush1.msra.mxu0 0.0
    %132 = vmatprep.subr.mxu0 0.0
    %133 = vmatpush1.msra.mxu0 0.0
    %134 = vmatprep.subr.mxu0 0.0
    %135 = vmatpush1.msra.mxu0 0.0
    %136 = vmatprep.subr.mxu0 0.0
    %137 = vmatpush1.msra.mxu0 0.0
    %138 = vmatprep.mubr.f32.mxu0 0.0
    %139 = vmatmul.mubr.f32.gmra.mrb[0].mxu0 %v72
    %v140 = vpop.f32.mrb[0].mxu0
    %v141 = vadd.f32 %v68, %v140
    %v142 = vpop.f32.mrb[0].mxu0
    %143 = vdwg.mxu0
    %v144 = vmul.f32 %v141, 0.1
    %v145 = vmax.f32 %v141, %v144
    %v146 = vld [vmem:[#allocation7] sm:$0xff]
    %v147 = vld [vmem:[#allocation7 + $0x8] sm:$0xff]
    %v148 = vld [vmem:[#allocation7 + $0x10] sm:$0xff]
    %v149 = vld [vmem:[#allocation7 + $0x18] sm:$0xff]
    %v150 = vld [vmem:[#allocation7 + $0x20] sm:$0xff]
    %v151 = vld [vmem:[#allocation7 + $0x28] sm:$0xff]
    %v152 = vld [vmem:[#allocation7 + $0x30] sm:$0xff]
    %v153 = vld [vmem:[#allocation7 + $0x38] sm:$0xff]
    %v154 = vld [vmem:[#allocation7 + $0x40] sm:$0xff]
    %v155 = vld [vmem:[#allocation7 + $0x48] sm:$0xff]
    %v156 = vld [vmem:[#allocation7 + $0x50] sm:$0xff]
    %v157 = vld [vmem:[#allocation7 + $0x58] sm:$0xff]
    %v158 = vld [vmem:[#allocation7 + $0x60] sm:$0xff]
    %v159 = vld [vmem:[#allocation7 + $0x68] sm:$0xff]
    %v160 = vld [vmem:[#allocation7 + $0x70] sm:$0xff]
    %v161 = vld [vmem:[#allocation7 + $0x78] sm:$0xff]
    %v162 = vld [vmem:[%s4] sm:$0x1]
    %v164 = vlaneseq
    %v165 = vshrl.u32 %v164, 7
    %v166 = vsub.s32 0, %v165
    %v167 = vrot.slane %v162, %v166
    %169 = vmatprep.subr.mxu0 0.0
    %170 = vmatpush1.msra.mxu0 %v146
    %171 = vmatprep.subr.mxu0 0.0
    %172 = vmatpush1.msra.mxu0 %v147
    %173 = vmatprep.subr.mxu0 0.0
    %174 = vmatpush1.msra.mxu0 %v148
    %175 = vmatprep.subr.mxu0 0.0
    %176 = vmatpush1.msra.mxu0 %v149
    %177 = vmatprep.subr.mxu0 0.0
    %178 = vmatpush1.msra.mxu0 %v150
    %179 = vmatprep.subr.mxu0 0.0
    %180 = vmatpush1.msra.mxu0 %v151
    %181 = vmatprep.subr.mxu0 0.0
    %182 = vmatpush1.msra.mxu0 %v152
    %183 = vmatprep.subr.mxu0 0.0
    %184 = vmatpush1.msra.mxu0 %v153
    %185 = vmatprep.subr.mxu0 0.0
    %186 = vmatpush1.msra.mxu0 %v154
    %187 = vmatprep.subr.mxu0 0.0
    %188 = vmatpush1.msra.mxu0 %v155
    %189 = vmatprep.subr.mxu0 0.0
    %190 = vmatpush1.msra.mxu0 %v156
    %191 = vmatprep.subr.mxu0 0.0
    %192 = vmatpush1.msra.mxu0 %v157
    %193 = vmatprep.subr.mxu0 0.0
    %194 = vmatpush1.msra.mxu0 %v158
    %195 = vmatprep.subr.mxu0 0.0
    %196 = vmatpush1.msra.mxu0 %v159
    %197 = vmatprep.subr.mxu0 0.0
    %198 = vmatpush1.msra.mxu0 %v160
    %199 = vmatprep.subr.mxu0 0.0
    %200 = vmatpush1.msra.mxu0 %v161
    %201 = vmatprep.subr.mxu0 0.0
    %202 = vmatpush1.msra.mxu0 0.0
    %203 = vmatprep.subr.mxu0 0.0
    %204 = vmatpush1.msra.mxu0 0.0
    %205 = vmatprep.subr.mxu0 0.0
    %206 = vmatpush1.msra.mxu0 0.0
    %207 = vmatprep.subr.mxu0 0.0
    %208 = vmatpush1.msra.mxu0 0.0
    %209 = vmatprep.subr.mxu0 0.0
    %210 = vmatpush1.msra.mxu0 0.0
    %211 = vmatprep.subr.mxu0 0.0
    %212 = vmatpush1.msra.mxu0 0.0
    %213 = vmatprep.subr.mxu0 0.0
    %214 = vmatpush1.msra.mxu0 0.0
    %215 = vmatprep.subr.mxu0 0.0
    %216 = vmatpush1.msra.mxu0 0.0
    %217 = vmatprep.subr.mxu0 0.0
    %218 = vmatpush1.msra.mxu0 0.0
    %219 = vmatprep.subr.mxu0 0.0
    %220 = vmatpush1.msra.mxu0 0.0
    %221 = vmatprep.subr.mxu0 0.0
    %222 = vmatpush1.msra.mxu0 0.0
    %223 = vmatprep.subr.mxu0 0.0
    %224 = vmatpush1.msra.mxu0 0.0
    %225 = vmatprep.subr.mxu0 0.0
    %226 = vmatpush1.msra.mxu0 0.0
    %227 = vmatprep.subr.mxu0 0.0
    %228 = vmatpush1.msra.mxu0 0.0
    %229 = vmatprep.subr.mxu0 0.0
    %230 = vmatpush1.msra.mxu0 0.0
    %231 = vmatprep.subr.mxu0 0.0
    %232 = vmatpush1.msra.mxu0 0.0
    %233 = vmatprep.mubr.f32.mxu0 0.0
    %234 = vmatmul.mubr.f32.gmra.mrb[0].mxu0 %v145
    %v235 = vpop.f32.mrb[0].mxu0
    %v236 = vadd.f32 %v167, %v235
    %v237 = vpop.f32.mrb[0].mxu0
    %238 = vdwg.mxu0
    %v239 = vtanh.pop %v236
    %240 = vst [vmem:[#allocation8] sm:$0xff] %v239
    // Predicated region
    $region34: #{_generator_forward.1} parent=1 // pred_check
      _
    $region35: #{_generator_forward.1} parent=1 // pred_check_branch
      %242 = sbr.rel (0) target = $region37
    $region36: #{_generator_forward.1} parent=1 // pred_region
      %s244 = ssub.s32 128, 128
      %245 = vsyncadd [#allocation4], %s244
      %s247 = sshll.u32 [#allocation8], 4
      %s248 = int_to_ptr.vmem [resolvable:$true] %s247
      %250 = dma.vmem_to_hbm [thread:$0]  %s248, 128, %s5, [#allocation4]
    $region37: #{_generator_forward.1} parent=1 // pred_fallthru
      _
    // Predicated region
    $region38: #{_generator_forward.1} parent=1 // pred_check
      _
    $region39: #{_generator_forward.1} parent=1 // pred_check_branch
      %252 = sbr.rel (0) target = $region41
    $region40: #{_generator_forward.1} parent=1 // pred_region
      %253 = dma.done [#allocation4], 128
    $region41: #{_generator_forward.1} parent=1 // pred_fallthru
      _
    %254 = vsyncpa [#allocation3], 1
    %255 = vsyncpa [#allocation6], 1
    %256 = vsyncpa [#allocation4], 1

</llo_original>
